<compile_context>
chip_gen: v7x
topology: tpu7x:2x2x1
jax: 0.10.0
libtpu: 0.0.40
codegen_flags: <defaults>
</compile_context>

<pallas_src>
import jax
import jax.numpy as jnp
from jax.experimental import pallas as pl
from jax.experimental.pallas import tpu as pltpu

_LANE = 128
_TARGET_TILE_BYTES = 2 * 1024 * 1024   # ~2 MiB of x HBM traffic per grid step
_X_VMEM_BUDGET = 12 * 1024 * 1024      # double-buffered x budget; fits v5e's
                                       # 16 MiB scoped default with headroom
_VMEM_LIMIT = 32 * 1024 * 1024         # <= physical VMEM on v5e/v6e/v7x


def _round_up(n, m):
    return ((n + m - 1) // m) * m


def _meta_sampler_kernel(x_ref, w1_ref, b1_ref, w2_ref, b2_ref, o_ref):
    # fc1 on the MXU; f32 accumulation regardless of the streaming dtype.
    h = jnp.dot(x_ref[...], w1_ref[...], preferred_element_type=jnp.float32)
    h = jnp.maximum(h + b1_ref[...], 0.0)          # bias + ReLU (VPU, f32)
    # fc2 (128 -> 1) on the MXU: no VPU mul / XLU reduce / relayout needed,
    # and the (tb, 1) store is tiny.
    z = jnp.dot(h, w2_ref[...], preferred_element_type=jnp.float32)  # (tb, 1)
    # b2 is a scalar read from SMEM; sigmoid runs on the EUP in f32.
    o_ref[...] = jax.nn.sigmoid(z + b2_ref[0])


def meta_sampler_forward(x, w1, b1, w2, b2):
    """MetaSampler.forward: sigmoid(relu(x @ W1 + b1) @ W2 + b2).

    x: (B, D_in) f32 or bf16 -> (B, 1) f32 (matches torch's fc2 output shape).
    bf16 inputs stream as bf16 (HBM-traffic win); accumulation is always f32.
    """
    B, d_in = x.shape
    hidden = w1.shape[1]

    # Keep the producer's dtype if it is bf16/f32; anything else falls back to
    # f32.  (A wrapper-side bf16 cast of an f32 producer would add its own HBM
    # pass and negate the win, so we never down-cast here.)
    if x.dtype not in (jnp.bfloat16, jnp.float32):
        x = x.astype(jnp.float32)
    compute_dtype = x.dtype
    itemsize = jnp.dtype(compute_dtype).itemsize

    # Small parameters.  W1 matches x's dtype for a native MXU matmul; the
    # post-matmul VPU/EUP math stays f32 (v5e has no bf16 VPU/EUP).
    w1_m = w1.astype(compute_dtype)                      # (D_in, 128)
    b1_2d = b1.reshape(1, hidden).astype(jnp.float32)    # (1, 128)
    w2_col = w2.reshape(hidden, 1).astype(jnp.float32)   # (128, 1)
    b2_1d = b2.reshape(1).astype(jnp.float32)            # SMEM scalar

    # ---- Batch-tile selection (traffic-, VMEM- and megacore-aware) ---------
    # Per-step HBM traffic is tb * d_in * itemsize; target ~2 MiB so the
    # ~600-cycle per-step overhead is amortized.
    tb_traffic = _round_up(
        max(_TARGET_TILE_BYTES // max(itemsize * d_in, 1), 1), _LANE)
    # VMEM: the x block is lane-padded to round_up(d_in, 128) lanes and
    # double-buffered; budget it under v5e's 16 MiB scoped default.  The
    # resident W1/b1/w2 blocks add well under 1 MiB for realistic d_in.
    d_in_pad = _round_up(d_in, _LANE)
    tb_vmem = max(
        (_X_VMEM_BUDGET // (2 * d_in_pad * itemsize)) // _LANE * _LANE, _LANE)
    b_pad128 = _round_up(max(B, 1), _LANE)
    tb = min(tb_traffic, tb_vmem, b_pad128)
    # v7x megacore: guarantee >= 2 grid steps whenever the batch can supply two
    # >=128-row tiles so ("parallel",) actually splits work across both
    # TensorCores (no-op on single-TC v5e/v6e).
    if b_pad128 // tb < 2 and b_pad128 >= 2 * _LANE:
        tb = min(tb, _round_up(pl.cdiv(b_pad128, 2), _LANE))

    b_pad = _round_up(B, tb)
    if b_pad != B:
        x = jnp.pad(x, ((0, b_pad - B), (0, 0)))   # pad ragged batch tail
    grid = (b_pad // tb,)

    cost = pl.CostEstimate(
        flops=2 * B * d_in * hidden + 2 * B * hidden,
        transcendentals=B,
        bytes_accessed=(B * d_in * itemsize + B * 4
                        + d_in * hidden * itemsize + (2 * hidden + 1) * 4),
    )

    out = pl.pallas_call(
        _meta_sampler_kernel,
        out_shape=jax.ShapeDtypeStruct((b_pad, 1), jnp.float32),
        grid=grid,
        in_specs=[
            pl.BlockSpec((tb, d_in), lambda i: (i, 0)),          # x: pipelined
            pl.BlockSpec((d_in, hidden), lambda i: (0, 0)),      # W1: resident
            pl.BlockSpec((1, hidden), lambda i: (0, 0)),         # b1
            pl.BlockSpec((hidden, 1), lambda i: (0, 0)),         # w2 column
            pl.BlockSpec(memory_space=pltpu.MemorySpace.SMEM),   # b2 scalar
        ],
        out_specs=pl.BlockSpec((tb, 1), lambda i: (i, 0)),
        compiler_params=pltpu.CompilerParams(
            dimension_semantics=("parallel",),   # shard batch axis across TCs
            vmem_limit_bytes=_VMEM_LIMIT,
        ),
        cost_estimate=cost,
    )(x, w1_m, b1_2d, w2_col, b2_1d)

    # Padded tail rows (>= B) hold garbage-but-finite sigmoid values; slice off.
    return out[:B]


def init_params(key, input_size, hidden=128):
    """Deterministic init mimicking nn.Linear (uniform +/- 1/sqrt(fan_in))."""
    k1, k2, k3, k4 = jax.random.split(key, 4)
    bound1 = 1.0 / jnp.sqrt(jnp.float32(input_size))
    bound2 = 1.0 / jnp.sqrt(jnp.float32(hidden))
    w1 = jax.random.uniform(k1, (input_size, hidden), jnp.float32,
                            -bound1, bound1)
    b1 = jax.random.uniform(k2, (hidden,), jnp.float32, -bound1, bound1)
    w2 = jax.random.uniform(k3, (hidden, 1), jnp.float32, -bound2, bound2)
    b2 = jax.random.uniform(k4, (1,), jnp.float32, -bound2, bound2)
    return w1, b1, w2, b2


def _ref_forward(x, w1, b1, w2, b2):
    return jax.nn.sigmoid(jnp.maximum(x @ w1 + b1, 0.0) @ w2 + b2)


if __name__ == "__main__":
    key = jax.random.PRNGKey(0)
    k_x, k_p, k_x2 = jax.random.split(key, 3)

    # Small shapes consistent with the module: batch=8, input_size=32.
    B, D_IN = 8, 32
    x = jax.random.normal(k_x, (B, D_IN), jnp.float32)
    w1, b1, w2, b2 = init_params(k_p, D_IN)

    out = jax.block_until_ready(meta_sampler_forward(x, w1, b1, w2, b2))
    ref = _ref_forward(x, w1, b1, w2, b2)
    assert out.shape == (B, 1)
    assert jnp.allclose(out, ref, atol=1e-5, rtol=1e-4)

    # Multi-tile / ragged-batch / megacore path: B=600 -> tb=384, padded to
    # 768 rows, grid=(2,), parallel batch axis.
    B2 = 600
    x2 = jax.random.normal(k_x2, (B2, D_IN), jnp.float32)
    out2 = jax.block_until_ready(meta_sampler_forward(x2, w1, b1, w2, b2))
    ref2 = _ref_forward(x2, w1, b1, w2, b2)
    assert out2.shape == (B2, 1)
    assert jnp.allclose(out2, ref2, atol=1e-5, rtol=1e-4)

    # bf16 activation-streaming path (halves dominant HBM traffic); the MXU
    # still accumulates in f32, so results stay close to the f32 reference.
    out_bf = jax.block_until_ready(
        meta_sampler_forward(x2.astype(jnp.bfloat16), w1, b1, w2, b2))
    assert out_bf.shape == (B2, 1)
    assert jnp.allclose(out_bf, ref2, atol=2e-2)

    print("KERNEL_OK")
</pallas_src>

<mosaic_0001>
module attributes {stable_mosaic.version = 11 : i64} {
  func.func @_meta_sampler_kernel(%arg0: i32, %arg1: memref<128x32xf32, #tpu.memory_space<vmem>>, %arg2: memref<32x128xf32, #tpu.memory_space<vmem>>, %arg3: memref<1x128xf32, #tpu.memory_space<vmem>>, %arg4: memref<128x1xf32, #tpu.memory_space<vmem>>, %arg5: memref<1xf32, #tpu.memory_space<smem>>, %arg6: memref<128x1xf32, #tpu.memory_space<vmem>>) attributes {dimension_semantics = [#tpu.dimension_semantics<parallel>], iteration_bounds = array<i64: 1>, scalar_prefetch = 0 : i64, scratch_operands = 0 : i64, tpu.core_type = #tpu.core_type<tc>, window_params = [{transform_indices = @transform_0, window_bounds = array<i64: 128, 32>}, {pipeline_mode = #tpu.pipeline_mode<synchronous>, transform_indices = @transform_1, window_bounds = array<i64: 32, 128>}, {pipeline_mode = #tpu.pipeline_mode<synchronous>, transform_indices = @transform_2, window_bounds = array<i64: 1, 128>}, {pipeline_mode = #tpu.pipeline_mode<synchronous>, transform_indices = @transform_3, window_bounds = array<i64: 128, 1>}, {transform_indices = @transform_4, window_bounds = array<i64: 1>}, {transform_indices = @transform_5, window_bounds = array<i64: 128, 1>}]} {
    %c0 = arith.constant 0 : index
    %c0_0 = arith.constant 0 : index
    %0 = vector.load %arg1[%c0, %c0_0] : memref<128x32xf32, #tpu.memory_space<vmem>>, vector<128x32xf32>
    %c0_1 = arith.constant 0 : index
    %c0_2 = arith.constant 0 : index
    %1 = vector.load %arg2[%c0_1, %c0_2] : memref<32x128xf32, #tpu.memory_space<vmem>>, vector<32x128xf32>
    %cst = arith.constant dense<0.000000e+00> : vector<128x128xf32>
    %2 = tpu.matmul %0, %1, %cst {dimension_numbers = #tpu.dot_dimension_numbers<[1], [0], [0], [1], [0, 0, 1, 1], [], []>} : vector<128x32xf32>, vector<32x128xf32>, vector<128x128xf32> -> vector<128x128xf32>
    %c0_3 = arith.constant 0 : index
    %c0_4 = arith.constant 0 : index
    %3 = vector.load %arg3[%c0_3, %c0_4] : memref<1x128xf32, #tpu.memory_space<vmem>>, vector<1x128xf32>
    %4 = vector.broadcast %3 : vector<1x128xf32> to vector<128x128xf32>
    %5 = arith.addf %2, %4 : vector<128x128xf32>
    %cst_5 = arith.constant 0.000000e+00 : f32
    %6 = vector.broadcast %cst_5 : f32 to vector<128x128xf32>
    %7 = arith.maximumf %5, %6 : vector<128x128xf32>
    %c0_6 = arith.constant 0 : index
    %c0_7 = arith.constant 0 : index
    %8 = vector.load %arg4[%c0_6, %c0_7] : memref<128x1xf32, #tpu.memory_space<vmem>>, vector<128x1xf32>
    %cst_8 = arith.constant dense<0.000000e+00> : vector<128x1xf32>
    %9 = tpu.matmul %7, %8, %cst_8 {dimension_numbers = #tpu.dot_dimension_numbers<[1], [0], [0], [1], [0, 0, 1, 1], [], []>} : vector<128x128xf32>, vector<128x1xf32>, vector<128x1xf32> -> vector<128x1xf32>
    %c0_9 = arith.constant 0 : index
    %10 = memref.load %arg5[%c0_9] : memref<1xf32, #tpu.memory_space<smem>>
    %11 = vector.broadcast %10 : f32 to vector<128x1xf32>
    %12 = arith.addf %9, %11 : vector<128x1xf32>
    %13 = arith.negf %12 : vector<128x1xf32>
    %14 = math.exp %13 : vector<128x1xf32>
    %cst_10 = arith.constant 1.000000e+00 : f32
    %15 = vector.broadcast %cst_10 : f32 to vector<128x1xf32>
    %16 = arith.addf %15, %14 : vector<128x1xf32>
    %17 = arith.divf %15, %16 : vector<128x1xf32>
    %c0_11 = arith.constant 0 : index
    %c0_12 = arith.constant 0 : index
    %18 = vector.load %arg6[%c0_11, %c0_12] : memref<128x1xf32, #tpu.memory_space<vmem>>, vector<128x1xf32>
    tpu.vector_store %arg6[%c0_11, %c0_12], %17 {strides = array<i32>} : memref<128x1xf32, #tpu.memory_space<vmem>>, vector<128x1xf32>,
    return
  }
  func.func @transform_0(%arg0: i32) -> (i32, i32) {
    %c0_i32 = arith.constant 0 : i32
    %c0_i32_0 = arith.constant 0 : i32
    return %arg0, %c0_i32 : i32, i32
  }
  func.func @transform_1(%arg0: i32) -> (i32, i32) {
    %c0_i32 = arith.constant 0 : i32
    %c0_i32_0 = arith.constant 0 : i32
    %c0_i32_1 = arith.constant 0 : i32
    return %c0_i32, %c0_i32_0 : i32, i32
  }
  func.func @transform_2(%arg0: i32) -> (i32, i32) {
    %c0_i32 = arith.constant 0 : i32
    %c0_i32_0 = arith.constant 0 : i32
    %c0_i32_1 = arith.constant 0 : i32
    return %c0_i32, %c0_i32_0 : i32, i32
  }
  func.func @transform_3(%arg0: i32) -> (i32, i32) {
    %c0_i32 = arith.constant 0 : i32
    %c0_i32_0 = arith.constant 0 : i32
    %c0_i32_1 = arith.constant 0 : i32
    return %c0_i32, %c0_i32_0 : i32, i32
  }
  func.func @transform_4(%arg0: i32) -> i32 {
    %c0_i32 = arith.constant 0 : i32
    %c0_i32_0 = arith.constant 0 : i32
    return %c0_i32 : i32
  }
  func.func @transform_5(%arg0: i32) -> (i32, i32) {
    %c0_i32 = arith.constant 0 : i32
    %c0_i32_0 = arith.constant 0 : i32
    return %arg0, %c0_i32 : i32, i32
  }
}

</mosaic_0001>

<llo_original>
// kernel: tpu_custom_call.1
$region0: #{tpu_custom_call.1}
  #allocation0 [shape = 'u32[]', space=smem, size = 0x4, offset = 0x4, fixed_abs, tag = 'smem constant byte address 0x4 - core index']
  #allocation1 [shape = 'u32[144,128]{1,0:T(1,128)}', space=vmem, size = 0x12000, scoped, tag = 'internal scratch']
  #allocation2 [shape = 'f32[1]{0:T(128)S(6)}', space=smem, size = 0x200, scoped, tag = 'scoped memory for tpu_custom_call.1']
  %s0 = inlined_call_operand.vmem [shape: f32[128,32], index: 0, kind: input, shape index: {}]
  %s1 = inlined_call_operand.vmem [shape: f32[32,128], index: 1, kind: input, shape index: {}]
  %s2 = inlined_call_operand.vmem [shape: f32[1,128], index: 2, kind: input, shape index: {}]
  %s3 = inlined_call_operand.vmem [shape: f32[128,1], index: 3, kind: input, shape index: {}]
  %s4 = inlined_call_operand.<no memory space> [shape: f32[1], index: 4, kind: input, shape index: {}]
  %s5 = inlined_call_operand.vmem [shape: f32[128,1], index: 5, kind: output, shape index: {}]
  %s6 = sld [smem:[#allocation0]]
  $region30: #{tpu_custom_call.1} parent=0
    _
  %s8 = ssub.s32 1, %s6
  %s9 = scalar_select 0, %s8, %s6
  %10 = sst [smem:[#allocation2]] %s4
  // Predicated region
  $region2: #{tpu_custom_call.1} parent=0 // pred_check
    _
  $region3: #{tpu_custom_call.1} parent=0 // pred_check_branch
    %12 = sbr.rel (0) target = $region5
  $region4: #{tpu_custom_call.1} parent=0 // pred_region
    _
  $region5: #{tpu_custom_call.1} parent=0 // pred_fallthru
    _
  // Predicated region
  $region6: #{tpu_custom_call.1} parent=0 // pred_check
    _
  $region7: #{tpu_custom_call.1} parent=0 // pred_check_branch
    %14 = sbr.rel (0) target = $region9
  $region8: #{tpu_custom_call.1} parent=0 // pred_region
    _
  $region9: #{tpu_custom_call.1} parent=0 // pred_fallthru
    _
  // Predicated region
  $region10: #{tpu_custom_call.1} parent=0 // pred_check
    _
  $region11: #{tpu_custom_call.1} parent=0 // pred_check_branch
    %16 = sbr.rel (0) target = $region13
  $region12: #{tpu_custom_call.1} parent=0 // pred_region
    _
  $region13: #{tpu_custom_call.1} parent=0 // pred_fallthru
    _
  // Predicated region
  $region14: #{tpu_custom_call.1} parent=0 // pred_check
    _
  $region15: #{tpu_custom_call.1} parent=0 // pred_check_branch
    %18 = sbr.rel (0) target = $region17
  $region16: #{tpu_custom_call.1} parent=0 // pred_region
    _
  $region17: #{tpu_custom_call.1} parent=0 // pred_fallthru
    _
  // Predicated region
  $region18: #{tpu_custom_call.1} parent=0 // pred_check
    _
  $region19: #{tpu_custom_call.1} parent=0 // pred_check_branch
    %20 = sbr.rel (0) target = $region21
  $region20: #{tpu_custom_call.1} parent=0 // pred_region
    _
  $region21: #{tpu_custom_call.1} parent=0 // pred_fallthru
    _
  %v21 = vld [vmem:[%s0] sm:$0xff]
  %v22 = vld [vmem:[%s0 + $0x8] sm:$0xff]
  %v23 = vld [vmem:[%s0 + $0x10] sm:$0xff]
  %v24 = vld [vmem:[%s0 + $0x18] sm:$0xff]
  %v25 = vld [vmem:[%s0 + $0x20] sm:$0xff]
  %v26 = vld [vmem:[%s0 + $0x28] sm:$0xff]
  %v27 = vld [vmem:[%s0 + $0x30] sm:$0xff]
  %v28 = vld [vmem:[%s0 + $0x38] sm:$0xff]
  %v29 = vld [vmem:[%s0 + $0x40] sm:$0xff]
  %v30 = vld [vmem:[%s0 + $0x48] sm:$0xff]
  %v31 = vld [vmem:[%s0 + $0x50] sm:$0xff]
  %v32 = vld [vmem:[%s0 + $0x58] sm:$0xff]
  %v33 = vld [vmem:[%s0 + $0x60] sm:$0xff]
  %v34 = vld [vmem:[%s0 + $0x68] sm:$0xff]
  %v35 = vld [vmem:[%s0 + $0x70] sm:$0xff]
  %v36 = vld [vmem:[%s0 + $0x78] sm:$0xff]
  %v37 = vld [vmem:[%s1] sm:$0xff]
  %v38 = vld [vmem:[%s1 + $0x8] sm:$0xff]
  %v39 = vld [vmem:[%s1 + $0x10] sm:$0xff]
  %v40 = vld [vmem:[%s1 + $0x18] sm:$0xff]
  %v41 = vld [vmem:[%s2] sm:$0x1]
  %v43 = vlaneseq
  %v44 = vshrl.u32 %v43, 7
  %v45 = vsub.s32 0, %v44
  %v46 = vrot.slane %v41, %v45
  %vm48 = vcmask 261120
  %v50 = vsel %vm48, %v21, 0
  %v53 = vsel %vm48, %v22, 0
  %v56 = vsel %vm48, %v23, 0
  %v59 = vsel %vm48, %v24, 0
  %v62 = vsel %vm48, %v25, 0
  %v65 = vsel %vm48, %v26, 0
  %v68 = vsel %vm48, %v27, 0
  %v71 = vsel %vm48, %v28, 0
  %v74 = vsel %vm48, %v29, 0
  %v77 = vsel %vm48, %v30, 0
  %v80 = vsel %vm48, %v31, 0
  %v83 = vsel %vm48, %v32, 0
  %v86 = vsel %vm48, %v33, 0
  %v89 = vsel %vm48, %v34, 0
  %v92 = vsel %vm48, %v35, 0
  %v95 = vsel %vm48, %v36, 0
  %97 = vmatprep.subr.mxu0 0.0
  %98 = vmatpush1.msra.mxu0 %v37
  %99 = vmatprep.subr.mxu0 0.0
  %100 = vmatpush1.msra.mxu0 %v38
  %101 = vmatprep.subr.mxu0 0.0
  %102 = vmatpush1.msra.mxu0 %v39
  %103 = vmatprep.subr.mxu0 0.0
  %104 = vmatpush1.msra.mxu0 %v40
  %105 = vmatprep.subr.mxu0 0.0
  %106 = vmatpush1.msra.mxu0 0.0
  %107 = vmatprep.subr.mxu0 0.0
  %108 = vmatpush1.msra.mxu0 0.0
  %109 = vmatprep.subr.mxu0 0.0
  %110 = vmatpush1.msra.mxu0 0.0
  %111 = vmatprep.subr.mxu0 0.0
  %112 = vmatpush1.msra.mxu0 0.0
  %113 = vmatprep.subr.mxu0 0.0
  %114 = vmatpush1.msra.mxu0 0.0
  %115 = vmatprep.subr.mxu0 0.0
  %116 = vmatpush1.msra.mxu0 0.0
  %117 = vmatprep.subr.mxu0 0.0
  %118 = vmatpush1.msra.mxu0 0.0
  %119 = vmatprep.subr.mxu0 0.0
  %120 = vmatpush1.msra.mxu0 0.0
  %121 = vmatprep.subr.mxu0 0.0
  %122 = vmatpush1.msra.mxu0 0.0
  %123 = vmatprep.subr.mxu0 0.0
  %124 = vmatpush1.msra.mxu0 0.0
  %125 = vmatprep.subr.mxu0 0.0
  %126 = vmatpush1.msra.mxu0 0.0
  %127 = vmatprep.subr.mxu0 0.0
  %128 = vmatpush1.msra.mxu0 0.0
  %129 = vmatprep.subr.mxu0 0.0
  %130 = vmatpush1.msra.mxu0 0.0
  %131 = vmatprep.subr.mxu0 0.0
  %132 = vmatpush1.msra.mxu0 0.0
  %133 = vmatprep.subr.mxu0 0.0
  %134 = vmatpush1.msra.mxu0 0.0
  %135 = vmatprep.subr.mxu0 0.0
  %136 = vmatpush1.msra.mxu0 0.0
  %137 = vmatprep.subr.mxu0 0.0
  %138 = vmatpush1.msra.mxu0 0.0
  %139 = vmatprep.subr.mxu0 0.0
  %140 = vmatpush1.msra.mxu0 0.0
  %141 = vmatprep.subr.mxu0 0.0
  %142 = vmatpush1.msra.mxu0 0.0
  %143 = vmatprep.subr.mxu0 0.0
  %144 = vmatpush1.msra.mxu0 0.0
  %145 = vmatprep.subr.mxu0 0.0
  %146 = vmatpush1.msra.mxu0 0.0
  %147 = vmatprep.subr.mxu0 0.0
  %148 = vmatpush1.msra.mxu0 0.0
  %149 = vmatprep.subr.mxu0 0.0
  %150 = vmatpush1.msra.mxu0 0.0
  %151 = vmatprep.subr.mxu0 0.0
  %152 = vmatpush1.msra.mxu0 0.0
  %153 = vmatprep.subr.mxu0 0.0
  %154 = vmatpush1.msra.mxu0 0.0
  %155 = vmatprep.subr.mxu0 0.0
  %156 = vmatpush1.msra.mxu0 0.0
  %157 = vmatprep.subr.mxu0 0.0
  %158 = vmatpush1.msra.mxu0 0.0
  %159 = vmatprep.subr.mxu0 0.0
  %160 = vmatpush1.msra.mxu0 0.0
  %161 = vmatprep.mubr.f32.mxu0 0.0
  %162 = vmatmul.mubr.f32.gmra.mrb[0].mxu0 %v50
  %v163 = vpop.f32.mrb[0].mxu0
  %v164 = vadd.f32 %v46, %v163
  %v165 = vpop.f32.mrb[0].mxu0
  %166 = vmatprep.mubr.f32.mxu0 0.0
  %167 = vmatmul.mubr.f32.gmra.mrb[0].mxu0 %v53
  %v168 = vpop.f32.mrb[0].mxu0
  %v169 = vadd.f32 %v46, %v168
  %v170 = vpop.f32.mrb[0].mxu0
  %171 = vmatprep.mubr.f32.mxu0 0.0
  %172 = vmatmul.mubr.f32.gmra.mrb[0].mxu0 %v56
  %v173 = vpop.f32.mrb[0].mxu0
  %v174 = vadd.f32 %v46, %v173
  %v175 = vpop.f32.mrb[0].mxu0
  %176 = vmatprep.mubr.f32.mxu0 0.0
  %177 = vmatmul.mubr.f32.gmra.mrb[0].mxu0 %v59
  %v178 = vpop.f32.mrb[0].mxu0
  %v179 = vadd.f32 %v46, %v178
  %v180 = vpop.f32.mrb[0].mxu0
  %181 = vmatprep.mubr.f32.mxu0 0.0
  %182 = vmatmul.mubr.f32.gmra.mrb[0].mxu0 %v62
  %v183 = vpop.f32.mrb[0].mxu0
  %v184 = vadd.f32 %v46, %v183
  %v185 = vpop.f32.mrb[0].mxu0
  %186 = vmatprep.mubr.f32.mxu0 0.0
  %187 = vmatmul.mubr.f32.gmra.mrb[0].mxu0 %v65
  %v188 = vpop.f32.mrb[0].mxu0
  %v189 = vadd.f32 %v46, %v188
  %v190 = vpop.f32.mrb[0].mxu0
  %191 = vmatprep.mubr.f32.mxu0 0.0
  %192 = vmatmul.mubr.f32.gmra.mrb[0].mxu0 %v68
  %v193 = vpop.f32.mrb[0].mxu0
  %v194 = vadd.f32 %v46, %v193
  %v195 = vpop.f32.mrb[0].mxu0
  %196 = vmatprep.mubr.f32.mxu0 0.0
  %197 = vmatmul.mubr.f32.gmra.mrb[0].mxu0 %v71
  %v198 = vpop.f32.mrb[0].mxu0
  %v199 = vadd.f32 %v46, %v198
  %v200 = vpop.f32.mrb[0].mxu0
  %201 = vmatprep.mubr.f32.mxu0 0.0
  %202 = vmatmul.mubr.f32.gmra.mrb[0].mxu0 %v74
  %v203 = vpop.f32.mrb[0].mxu0
  %v204 = vadd.f32 %v46, %v203
  %v205 = vpop.f32.mrb[0].mxu0
  %206 = vmatprep.mubr.f32.mxu0 0.0
  %207 = vmatmul.mubr.f32.gmra.mrb[0].mxu0 %v77
  %v208 = vpop.f32.mrb[0].mxu0
  %v209 = vadd.f32 %v46, %v208
  %v210 = vpop.f32.mrb[0].mxu0
  %211 = vmatprep.mubr.f32.mxu0 0.0
  %212 = vmatmul.mubr.f32.gmra.mrb[0].mxu0 %v80
  %v213 = vpop.f32.mrb[0].mxu0
  %v214 = vadd.f32 %v46, %v213
  %v215 = vpop.f32.mrb[0].mxu0
  %216 = vmatprep.mubr.f32.mxu0 0.0
  %217 = vmatmul.mubr.f32.gmra.mrb[0].mxu0 %v83
  %v218 = vpop.f32.mrb[0].mxu0
  %v219 = vadd.f32 %v46, %v218
  %v220 = vpop.f32.mrb[0].mxu0
  %221 = vmatprep.mubr.f32.mxu0 0.0
  %222 = vmatmul.mubr.f32.gmra.mrb[0].mxu0 %v86
  %v223 = vpop.f32.mrb[0].mxu0
  %v224 = vadd.f32 %v46, %v223
  %v225 = vpop.f32.mrb[0].mxu0
  %226 = vmatprep.mubr.f32.mxu0 0.0
  %227 = vmatmul.mubr.f32.gmra.mrb[0].mxu0 %v89
  %v228 = vpop.f32.mrb[0].mxu0
  %v229 = vadd.f32 %v46, %v228
  %v230 = vpop.f32.mrb[0].mxu0
  %231 = vmatprep.mubr.f32.mxu0 0.0
  %232 = vmatmul.mubr.f32.gmra.mrb[0].mxu0 %v92
  %v233 = vpop.f32.mrb[0].mxu0
  %v234 = vadd.f32 %v46, %v233
  %v235 = vpop.f32.mrb[0].mxu0
  %236 = vmatprep.mubr.f32.mxu0 0.0
  %237 = vmatmul.mubr.f32.gmra.mrb[0].mxu0 %v95
  %v238 = vpop.f32.mrb[0].mxu0
  %v239 = vadd.f32 %v46, %v238
  %v240 = vpop.f32.mrb[0].mxu0
  %241 = vdwg.mxu0
  %v242 = vmax.f32 %v164, 0.0
  %v243 = vmax.f32 %v169, 0.0
  %v244 = vmax.f32 %v174, 0.0
  %v245 = vmax.f32 %v179, 0.0
  %v246 = vmax.f32 %v184, 0.0
  %v247 = vmax.f32 %v189, 0.0
  %v248 = vmax.f32 %v194, 0.0
  %v249 = vmax.f32 %v199, 0.0
  %v250 = vmax.f32 %v204, 0.0
  %v251 = vmax.f32 %v209, 0.0
  %v252 = vmax.f32 %v214, 0.0
  %v253 = vmax.f32 %v219, 0.0
  %v254 = vmax.f32 %v224, 0.0
  %v255 = vmax.f32 %v229, 0.0
  %v256 = vmax.f32 %v234, 0.0
  %v257 = vmax.f32 %v239, 0.0
  %v258 = vld [vmem:[%s3] sm:$0xff]
  %v259 = vld [vmem:[%s3 + $0x8] sm:$0xff]
  %v260 = vld [vmem:[%s3 + $0x10] sm:$0xff]
  %v261 = vld [vmem:[%s3 + $0x18] sm:$0xff]
  %v262 = vld [vmem:[%s3 + $0x20] sm:$0xff]
  %v263 = vld [vmem:[%s3 + $0x28] sm:$0xff]
  %v264 = vld [vmem:[%s3 + $0x30] sm:$0xff]
  %v265 = vld [vmem:[%s3 + $0x38] sm:$0xff]
  %v266 = vld [vmem:[%s3 + $0x40] sm:$0xff]
  %v267 = vld [vmem:[%s3 + $0x48] sm:$0xff]
  %v268 = vld [vmem:[%s3 + $0x50] sm:$0xff]
  %v269 = vld [vmem:[%s3 + $0x58] sm:$0xff]
  %v270 = vld [vmem:[%s3 + $0x60] sm:$0xff]
  %v271 = vld [vmem:[%s3 + $0x68] sm:$0xff]
  %v272 = vld [vmem:[%s3 + $0x70] sm:$0xff]
  %v273 = vld [vmem:[%s3 + $0x78] sm:$0xff]
  %s274 = sld [smem:[#allocation2]]
  %v275 = vstv %s274
  %276 = vmatprep.subr.mxu0 0.0
  %277 = vmatpush1.msra.mxu0 %v258
  %278 = vmatprep.subr.mxu0 0.0
  %279 = vmatpush1.msra.mxu0 %v259
  %280 = vmatprep.subr.mxu0 0.0
  %281 = vmatpush1.msra.mxu0 %v260
  %282 = vmatprep.subr.mxu0 0.0
  %283 = vmatpush1.msra.mxu0 %v261
  %284 = vmatprep.subr.mxu0 0.0
  %285 = vmatpush1.msra.mxu0 %v262
  %286 = vmatprep.subr.mxu0 0.0
  %287 = vmatpush1.msra.mxu0 %v263
  %288 = vmatprep.subr.mxu0 0.0
  %289 = vmatpush1.msra.mxu0 %v264
  %290 = vmatprep.subr.mxu0 0.0
  %291 = vmatpush1.msra.mxu0 %v265
  %292 = vmatprep.subr.mxu0 0.0
  %293 = vmatpush1.msra.mxu0 %v266
  %294 = vmatprep.subr.mxu0 0.0
  %295 = vmatpush1.msra.mxu0 %v267
  %296 = vmatprep.subr.mxu0 0.0
  %297 = vmatpush1.msra.mxu0 %v268
  %298 = vmatprep.subr.mxu0 0.0
  %299 = vmatpush1.msra.mxu0 %v269
  %300 = vmatprep.subr.mxu0 0.0
  %301 = vmatpush1.msra.mxu0 %v270
  %302 = vmatprep.subr.mxu0 0.0
  %303 = vmatpush1.msra.mxu0 %v271
  %304 = vmatprep.subr.mxu0 0.0
  %305 = vmatpush1.msra.mxu0 %v272
  %306 = vmatprep.subr.mxu0 0.0
  %307 = vmatpush1.msra.mxu0 %v273
  %308 = vmatprep.subr.mxu0 0.0
  %309 = vmatpush1.msra.mxu0 0.0
  %310 = vmatprep.subr.mxu0 0.0
  %311 = vmatpush1.msra.mxu0 0.0
  %312 = vmatprep.subr.mxu0 0.0
  %313 = vmatpush1.msra.mxu0 0.0
  %314 = vmatprep.subr.mxu0 0.0
  %315 = vmatpush1.msra.mxu0 0.0
  %316 = vmatprep.subr.mxu0 0.0
  %317 = vmatpush1.msra.mxu0 0.0
  %318 = vmatprep.subr.mxu0 0.0
  %319 = vmatpush1.msra.mxu0 0.0
  %320 = vmatprep.subr.mxu0 0.0
  %321 = vmatpush1.msra.mxu0 0.0
  %322 = vmatprep.subr.mxu0 0.0
  %323 = vmatpush1.msra.mxu0 0.0
  %324 = vmatprep.subr.mxu0 0.0
  %325 = vmatpush1.msra.mxu0 0.0
  %326 = vmatprep.subr.mxu0 0.0
  %327 = vmatpush1.msra.mxu0 0.0
  %328 = vmatprep.subr.mxu0 0.0
  %329 = vmatpush1.msra.mxu0 0.0
  %330 = vmatprep.subr.mxu0 0.0
  %331 = vmatpush1.msra.mxu0 0.0
  %332 = vmatprep.subr.mxu0 0.0
  %333 = vmatpush1.msra.mxu0 0.0
  %334 = vmatprep.subr.mxu0 0.0
  %335 = vmatpush1.msra.mxu0 0.0
  %336 = vmatprep.subr.mxu0 0.0
  %337 = vmatpush1.msra.mxu0 0.0
  %338 = vmatprep.subr.mxu0 0.0
  %339 = vmatpush1.msra.mxu0 0.0
  %340 = vmatprep.mubr.f32.mxu0 0.0
  %341 = vmatmul.mubr.f32.gmra.mrb[0].mxu0 %v242
  %v342 = vpop.f32.mrb[0].mxu0
  %v343 = vadd.f32 %v275, %v342
  %v344 = vpop.f32.mrb[0].mxu0
  %345 = vmatprep.mubr.f32.mxu0 0.0
  %346 = vmatmul.mubr.f32.gmra.mrb[0].mxu0 %v243
  %v347 = vpop.f32.mrb[0].mxu0
  %v348 = vadd.f32 %v275, %v347
  %v349 = vpop.f32.mrb[0].mxu0
  %350 = vmatprep.mubr.f32.mxu0 0.0
  %351 = vmatmul.mubr.f32.gmra.mrb[0].mxu0 %v244
  %v352 = vpop.f32.mrb[0].mxu0
  %v353 = vadd.f32 %v275, %v352
  %v354 = vpop.f32.mrb[0].mxu0
  %355 = vmatprep.mubr.f32.mxu0 0.0
  %356 = vmatmul.mubr.f32.gmra.mrb[0].mxu0 %v245
  %v357 = vpop.f32.mrb[0].mxu0
  %v358 = vadd.f32 %v275, %v357
  %v359 = vpop.f32.mrb[0].mxu0
  %360 = vmatprep.mubr.f32.mxu0 0.0
  %361 = vmatmul.mubr.f32.gmra.mrb[0].mxu0 %v246
  %v362 = vpop.f32.mrb[0].mxu0
  %v363 = vadd.f32 %v275, %v362
  %v364 = vpop.f32.mrb[0].mxu0
  %365 = vmatprep.mubr.f32.mxu0 0.0
  %366 = vmatmul.mubr.f32.gmra.mrb[0].mxu0 %v247
  %v367 = vpop.f32.mrb[0].mxu0
  %v368 = vadd.f32 %v275, %v367
  %v369 = vpop.f32.mrb[0].mxu0
  %370 = vmatprep.mubr.f32.mxu0 0.0
  %371 = vmatmul.mubr.f32.gmra.mrb[0].mxu0 %v248
  %v372 = vpop.f32.mrb[0].mxu0
  %v373 = vadd.f32 %v275, %v372
  %v374 = vpop.f32.mrb[0].mxu0
  %375 = vmatprep.mubr.f32.mxu0 0.0
  %376 = vmatmul.mubr.f32.gmra.mrb[0].mxu0 %v249
  %v377 = vpop.f32.mrb[0].mxu0
  %v378 = vadd.f32 %v275, %v377
  %v379 = vpop.f32.mrb[0].mxu0
  %380 = vmatprep.mubr.f32.mxu0 0.0
  %381 = vmatmul.mubr.f32.gmra.mrb[0].mxu0 %v250
  %v382 = vpop.f32.mrb[0].mxu0
  %v383 = vadd.f32 %v275, %v382
  %v384 = vpop.f32.mrb[0].mxu0
  %385 = vmatprep.mubr.f32.mxu0 0.0
  %386 = vmatmul.mubr.f32.gmra.mrb[0].mxu0 %v251
  %v387 = vpop.f32.mrb[0].mxu0
  %v388 = vadd.f32 %v275, %v387
  %v389 = vpop.f32.mrb[0].mxu0
  %390 = vmatprep.mubr.f32.mxu0 0.0
  %391 = vmatmul.mubr.f32.gmra.mrb[0].mxu0 %v252
  %v392 = vpop.f32.mrb[0].mxu0
  %v393 = vadd.f32 %v275, %v392
  %v394 = vpop.f32.mrb[0].mxu0
  %395 = vmatprep.mubr.f32.mxu0 0.0
  %396 = vmatmul.mubr.f32.gmra.mrb[0].mxu0 %v253
  %v397 = vpop.f32.mrb[0].mxu0
  %v398 = vadd.f32 %v275, %v397
  %v399 = vpop.f32.mrb[0].mxu0
  %400 = vmatprep.mubr.f32.mxu0 0.0
  %401 = vmatmul.mubr.f32.gmra.mrb[0].mxu0 %v254
  %v402 = vpop.f32.mrb[0].mxu0
  %v403 = vadd.f32 %v275, %v402
  %v404 = vpop.f32.mrb[0].mxu0
  %405 = vmatprep.mubr.f32.mxu0 0.0
  %406 = vmatmul.mubr.f32.gmra.mrb[0].mxu0 %v255
  %v407 = vpop.f32.mrb[0].mxu0
  %v408 = vadd.f32 %v275, %v407
  %v409 = vpop.f32.mrb[0].mxu0
  %410 = vmatprep.mubr.f32.mxu0 0.0
  %411 = vmatmul.mubr.f32.gmra.mrb[0].mxu0 %v256
  %v412 = vpop.f32.mrb[0].mxu0
  %v413 = vadd.f32 %v275, %v412
  %v414 = vpop.f32.mrb[0].mxu0
  %415 = vmatprep.mubr.f32.mxu0 0.0
  %416 = vmatmul.mubr.f32.gmra.mrb[0].mxu0 %v257
  %v417 = vpop.f32.mrb[0].mxu0
  %v418 = vadd.f32 %v275, %v417
  %v419 = vpop.f32.mrb[0].mxu0
  %420 = vdwg.mxu0
  %v421 = vxor.u32 %v343, 2147483648
  %v422 = vxor.u32 %v348, 2147483648
  %v423 = vxor.u32 %v353, 2147483648
  %v424 = vxor.u32 %v358, 2147483648
  %v425 = vxor.u32 %v363, 2147483648
  %v426 = vxor.u32 %v368, 2147483648
  %v427 = vxor.u32 %v373, 2147483648
  %v428 = vxor.u32 %v378, 2147483648
  %v429 = vxor.u32 %v383, 2147483648
  %v430 = vxor.u32 %v388, 2147483648
  %v431 = vxor.u32 %v393, 2147483648
  %v432 = vxor.u32 %v398, 2147483648
  %v433 = vxor.u32 %v403, 2147483648
  %v434 = vxor.u32 %v408, 2147483648
  %v435 = vxor.u32 %v413, 2147483648
  %v436 = vxor.u32 %v418, 2147483648
  %v437 = vmul.f32 %v421, 1.442695
  %v438 = vpow.pop %v437
  %v439 = vmul.f32 %v422, 1.442695
  %v440 = vpow.pop %v439
  %v441 = vmul.f32 %v423, 1.442695
  %v442 = vpow.pop %v441
  %v443 = vmul.f32 %v424, 1.442695
  %v444 = vpow.pop %v443
  %v445 = vmul.f32 %v425, 1.442695
  %v446 = vpow.pop %v445
  %v447 = vmul.f32 %v426, 1.442695
  %v448 = vpow.pop %v447
  %v449 = vmul.f32 %v427, 1.442695
  %v450 = vpow.pop %v449
  %v451 = vmul.f32 %v428, 1.442695
  %v452 = vpow.pop %v451
  %v453 = vmul.f32 %v429, 1.442695
  %v454 = vpow.pop %v453
  %v455 = vmul.f32 %v430, 1.442695
  %v456 = vpow.pop %v455
  %v457 = vmul.f32 %v431, 1.442695
  %v458 = vpow.pop %v457
  %v459 = vmul.f32 %v432, 1.442695
  %v460 = vpow.pop %v459
  %v461 = vmul.f32 %v433, 1.442695
  %v462 = vpow.pop %v461
  %v463 = vmul.f32 %v434, 1.442695
  %v464 = vpow.pop %v463
  %v465 = vmul.f32 %v435, 1.442695
  %v466 = vpow.pop %v465
  %v467 = vmul.f32 %v436, 1.442695
  %v468 = vpow.pop %v467
  %v469 = vadd.f32 %v438, 1.0
  %v470 = vadd.f32 %v440, 1.0
  %v471 = vadd.f32 %v442, 1.0
  %v472 = vadd.f32 %v444, 1.0
  %v473 = vadd.f32 %v446, 1.0
  %v474 = vadd.f32 %v448, 1.0
  %v475 = vadd.f32 %v450, 1.0
  %v476 = vadd.f32 %v452, 1.0
  %v477 = vadd.f32 %v454, 1.0
  %v478 = vadd.f32 %v456, 1.0
  %v479 = vadd.f32 %v458, 1.0
  %v480 = vadd.f32 %v460, 1.0
  %v481 = vadd.f32 %v462, 1.0
  %v482 = vadd.f32 %v464, 1.0
  %v483 = vadd.f32 %v466, 1.0
  %v484 = vadd.f32 %v468, 1.0
  %v485 = vrcp.pop %v469
  %v486 = vmul.f32 1.0, %v485
  %v487 = vrcp.pop %v470
  %v488 = vmul.f32 1.0, %v487
  %v489 = vrcp.pop %v471
  %v490 = vmul.f32 1.0, %v489
  %v491 = vrcp.pop %v472
  %v492 = vmul.f32 1.0, %v491
  %v493 = vrcp.pop %v473
  %v494 = vmul.f32 1.0, %v493
  %v495 = vrcp.pop %v474
  %v496 = vmul.f32 1.0, %v495
  %v497 = vrcp.pop %v475
  %v498 = vmul.f32 1.0, %v497
  %v499 = vrcp.pop %v476
  %v500 = vmul.f32 1.0, %v499
  %v501 = vrcp.pop %v477
  %v502 = vmul.f32 1.0, %v501
  %v503 = vrcp.pop %v478
  %v504 = vmul.f32 1.0, %v503
  %v505 = vrcp.pop %v479
  %v506 = vmul.f32 1.0, %v505
  %v507 = vrcp.pop %v480
  %v508 = vmul.f32 1.0, %v507
  %v509 = vrcp.pop %v481
  %v510 = vmul.f32 1.0, %v509
  %v511 = vrcp.pop %v482
  %v512 = vmul.f32 1.0, %v511
  %v513 = vrcp.pop %v483
  %v514 = vmul.f32 1.0, %v513
  %v515 = vrcp.pop %v484
  %v516 = vmul.f32 1.0, %v515
  %vm517 = vcmask 7168
  %518 = vst.msk [vmem:[%s5] sm:$0xff] %vm517, %v486
  %519 = vst.msk [vmem:[%s5 + $0x8] sm:$0xff] %vm517, %v488
  %520 = vst.msk [vmem:[%s5 + $0x10] sm:$0xff] %vm517, %v490
  %521 = vst.msk [vmem:[%s5 + $0x18] sm:$0xff] %vm517, %v492
  %522 = vst.msk [vmem:[%s5 + $0x20] sm:$0xff] %vm517, %v494
  %523 = vst.msk [vmem:[%s5 + $0x28] sm:$0xff] %vm517, %v496
  %524 = vst.msk [vmem:[%s5 + $0x30] sm:$0xff] %vm517, %v498
  %525 = vst.msk [vmem:[%s5 + $0x38] sm:$0xff] %vm517, %v500
  %526 = vst.msk [vmem:[%s5 + $0x40] sm:$0xff] %vm517, %v502
  %527 = vst.msk [vmem:[%s5 + $0x48] sm:$0xff] %vm517, %v504
  %528 = vst.msk [vmem:[%s5 + $0x50] sm:$0xff] %vm517, %v506
  %529 = vst.msk [vmem:[%s5 + $0x58] sm:$0xff] %vm517, %v508
  %530 = vst.msk [vmem:[%s5 + $0x60] sm:$0xff] %vm517, %v510
  %531 = vst.msk [vmem:[%s5 + $0x68] sm:$0xff] %vm517, %v512
  %532 = vst.msk [vmem:[%s5 + $0x70] sm:$0xff] %vm517, %v514
  %533 = vst.msk [vmem:[%s5 + $0x78] sm:$0xff] %vm517, %v516
  // Predicated region
  $region22: #{tpu_custom_call.1} parent=0 // pred_check
    _
  $region23: #{tpu_custom_call.1} parent=0 // pred_check_branch
    %535 = sbr.rel (0) target = $region25
  $region24: #{tpu_custom_call.1} parent=0 // pred_region
    _
  $region25: #{tpu_custom_call.1} parent=0 // pred_fallthru
    _
  // Predicated region
  $region26: #{tpu_custom_call.1} parent=0 // pred_check
    _
  $region27: #{tpu_custom_call.1} parent=0 // pred_check_branch
    %537 = sbr.rel (0) target = $region29
  $region28: #{tpu_custom_call.1} parent=0 // pred_region
    _
  $region29: #{tpu_custom_call.1} parent=0 // pred_fallthru
    _

</llo_original>
